<compile_context>
chip_gen: v6e
topology: v6e:2x2x1
jax: 0.10.0
libtpu: 0.0.40
codegen_flags: <defaults>
</compile_context>

<pallas_src>
import functools

import jax
import jax.numpy as jnp
from jax.experimental import pallas as pl
from jax.experimental.pallas import tpu as pltpu


def _round_up(v, m):
    return (v + m - 1) // m * m


def _has_bf16_vpu():
    """True on chips with a bf16 VPU path (v6e, v7x, ...); False on v5e and older."""
    try:
        kind = jax.devices()[0].device_kind.lower()
    except Exception:
        return False
    if "tpu" not in kind:
        return False
    return not any(old in kind for old in ("v2", "v3", "v4", "v5"))


def _default_vmem_limit_bytes():
    """Generation-aware VMEM cap, leaving headroom for Mosaic internal scratch."""
    try:
        cap = int(pltpu.get_tpu_info().vmem_capacity_bytes)
    except Exception:
        return 48 * 1024 * 1024                      # safe on every generation
    # ~54 MiB on v7x (64 MiB physical), ~108 MiB on v5e/v6e (128 MiB physical).
    return int(min(cap - 10 * 1024 * 1024, int(cap * 0.85)))


def _mlp_kernel(x_ref, w1_ref, b1_ref, w2_ref, b2_ref, o_ref):
    # x tile streamed in its original dtype; cast here (no extra wrapper HBM pass).
    x = x_ref[...].astype(w1_ref.dtype)                                   # (TM, D) bf16
    h = jnp.dot(x, w1_ref[...], preferred_element_type=jnp.float32)      # (TM, H) MXU
    # b1_ref's dtype selects the epilogue precision (bf16 on v6e/v7x, f32 on v5e).
    h = jnp.maximum(h.astype(b1_ref.dtype) + b1_ref[...], 0)             # bias + ReLU (VPU)
    y = jnp.dot(h.astype(w2_ref.dtype), w2_ref[...],
                preferred_element_type=jnp.float32)                       # (TM, C) MXU
    # Transpose-free (TM, C) store; the (B,N,C)->(B,C,N) permute runs outside.
    o_ref[...] = (y + b2_ref[...]).astype(o_ref.dtype)


def meta_learning_mlp(x, w1, b1, w2, b2, *, block_rows=512,
                      matmul_dtype=jnp.bfloat16, epilogue_dtype=None,
                      single_buffer_weights=True):
    """x: (B, N, D); w1: (D, H); b1: (H,)|(1,H); w2: (H, C); b2: (C,)|(1,C) -> (B, C, N)."""
    B, N, D = x.shape
    H = w1.shape[1]
    C = w2.shape[1]
    out_dtype = x.dtype
    if epilogue_dtype is None:
        epilogue_dtype = jnp.bfloat16 if _has_bf16_vpu() else jnp.float32

    M = B * N
    # Row tile: multiple of 8 (sublane); default 512 (sweep 512-1024 at prod sizes),
    # capped so the grid has >= 2 steps when M allows it (v7x has 2 TensorCores).
    TM = min(block_rows, _round_up(M, 8))
    if M > 8 and pl.cdiv(M, TM) < 2:
        TM = _round_up(pl.cdiv(M, 2), 8)
    grid = (pl.cdiv(M, TM),)

    # reshape is a free row-major collapse; x's dtype cast happens in-kernel.
    x2 = x.reshape(M, D)
    w1p = w1.astype(matmul_dtype)                     # tiny one-off casts (resident)
    w2p = w2.astype(matmul_dtype)
    b1p = b1.reshape(1, H).astype(epilogue_dtype)     # accepts (H,) or (1, H)
    b2p = b2.reshape(1, C).astype(jnp.float32)

    weight_mode = pl.Buffered(1) if single_buffer_weights else None

    cost = pl.CostEstimate(
        flops=2 * M * (D * H + H * C),
        transcendentals=0,
        bytes_accessed=(M * D * jnp.dtype(x.dtype).itemsize               # x
                        + (D * H + H * C) * jnp.dtype(matmul_dtype).itemsize  # weights
                        + H * jnp.dtype(epilogue_dtype).itemsize + C * 4      # biases
                        + M * C * jnp.dtype(out_dtype).itemsize),             # out
    )

    out = pl.pallas_call(
        _mlp_kernel,
        out_shape=jax.ShapeDtypeStruct((M, C), out_dtype),
        grid_spec=pltpu.PrefetchScalarGridSpec(
            num_scalar_prefetch=0,
            grid=grid,
            in_specs=[
                pl.BlockSpec((TM, D), lambda i: (i, 0)),                     # x rows (streamed, 2-buf)
                pl.BlockSpec((D, H), lambda i: (0, 0), pipeline_mode=weight_mode),  # W1 (resident)
                pl.BlockSpec((1, H), lambda i: (0, 0), pipeline_mode=weight_mode),  # b1 (resident)
                pl.BlockSpec((H, C), lambda i: (0, 0), pipeline_mode=weight_mode),  # W2 (resident)
                pl.BlockSpec((1, C), lambda i: (0, 0), pipeline_mode=weight_mode),  # b2 (resident)
            ],
            out_specs=pl.BlockSpec((TM, C), lambda i: (i, 0)),
        ),
        compiler_params=pltpu.CompilerParams(
            dimension_semantics=("parallel",),          # row tiles shard across TCs
            vmem_limit_bytes=_default_vmem_limit_bytes(),
        ),
        cost_estimate=cost,
    )(x2, w1p, b1p, w2p, b2p)

    # (M, C) -> (B, N, C) -> (B, C, N); a single cheap XLA permute, no slice needed.
    return jnp.transpose(out.reshape(B, N, C), (0, 2, 1))


if __name__ == "__main__":
    # Small shapes consistent with the module's forward contract.
    B, N, D, H, C = 2, 8, 16, 32, 8

    key = jax.random.PRNGKey(0)
    k_x, k_w1, k_b1, k_w2, k_b2 = jax.random.split(key, 5)

    # Deterministic params (mimics nn.Linear's uniform(-1/sqrt(fan_in), +)).
    lim1 = 1.0 / jnp.sqrt(jnp.float32(D))
    lim2 = 1.0 / jnp.sqrt(jnp.float32(H))
    w1 = jax.random.uniform(k_w1, (D, H), jnp.float32, -lim1, lim1)   # fc1.weight.T
    b1 = jax.random.uniform(k_b1, (H,), jnp.float32, -lim1, lim1)     # 1-D bias like nn.Linear
    w2 = jax.random.uniform(k_w2, (H, C), jnp.float32, -lim2, lim2)   # fc2.weight.T
    b2 = jax.random.uniform(k_b2, (C,), jnp.float32, -lim2, lim2)

    x = jax.random.normal(k_x, (B, N, D), jnp.float32)

    try:
        out = jax.block_until_ready(jax.jit(meta_learning_mlp)(x, w1, b1, w2, b2))
    except Exception:
        # Fallback in case this JAX build rejects single-buffered (Buffered(1)) specs.
        fn = functools.partial(meta_learning_mlp, single_buffer_weights=False)
        out = jax.block_until_ready(jax.jit(fn)(x, w1, b1, w2, b2))
    assert out.shape == (B, C, N), out.shape

    # Reference 1: matches the kernel's numerics (bf16 MXU operands, f32 accumulation,
    # epilogue precision picked the same way as inside the wrapper).
    bf = jnp.bfloat16
    epi = bf if _has_bf16_vpu() else jnp.float32
    h_ref = jnp.einsum("bnd,dh->bnh", x.astype(bf), w1.astype(bf),
                       preferred_element_type=jnp.float32)
    h_ref = jnp.maximum(h_ref.astype(epi) + b1.astype(epi), 0)
    y_ref = jnp.einsum("bnh,hc->bnc", h_ref.astype(bf), w2.astype(bf),
                       preferred_element_type=jnp.float32) + b2
    ref_matched = jnp.transpose(y_ref, (0, 2, 1))
    assert jnp.allclose(out, ref_matched, atol=2e-3, rtol=2e-3), "mismatch vs matched reference"

    # Reference 2: pure f32 PyTorch semantics (looser tol: MXU operands are bf16).
    ref_f32 = jnp.transpose(jnp.maximum(x @ w1 + b1, 0.0) @ w2 + b2, (0, 2, 1))
    assert jnp.allclose(out, ref_f32, atol=5e-2, rtol=5e-2), "mismatch vs f32 reference"

    print("KERNEL_OK")
</pallas_src>

<mosaic_0001>
module attributes {stable_mosaic.version = 11 : i64} {
  func.func @_mlp_kernel(%arg0: i32, %arg1: memref<8x16xf32, #tpu.memory_space<vmem>>, %arg2: memref<16x32xbf16, #tpu.memory_space<vmem>>, %arg3: memref<1x32xf32, #tpu.memory_space<vmem>>, %arg4: memref<32x8xbf16, #tpu.memory_space<vmem>>, %arg5: memref<1x8xf32, #tpu.memory_space<vmem>>, %arg6: memref<8x8xf32, #tpu.memory_space<vmem>>) attributes {dimension_semantics = [#tpu.dimension_semantics<parallel>], iteration_bounds = array<i64: 2>, scalar_prefetch = 0 : i64, scratch_operands = 0 : i64, tpu.core_type = #tpu.core_type<tc>, window_params = [{transform_indices = @transform_0, window_bounds = array<i64: 8, 16>}, {pipeline_mode = #tpu.pipeline_mode<synchronous>, transform_indices = @transform_1, window_bounds = array<i64: 16, 32>}, {pipeline_mode = #tpu.pipeline_mode<synchronous>, transform_indices = @transform_2, window_bounds = array<i64: 1, 32>}, {pipeline_mode = #tpu.pipeline_mode<synchronous>, transform_indices = @transform_3, window_bounds = array<i64: 32, 8>}, {pipeline_mode = #tpu.pipeline_mode<synchronous>, transform_indices = @transform_4, window_bounds = array<i64: 1, 8>}, {transform_indices = @transform_5, window_bounds = array<i64: 8, 8>}]} {
    %c0 = arith.constant 0 : index
    %c0_0 = arith.constant 0 : index
    %0 = vector.load %arg1[%c0, %c0_0] : memref<8x16xf32, #tpu.memory_space<vmem>>, vector<8x16xf32>
    %1 = arith.truncf %0 : vector<8x16xf32> to vector<8x16xbf16>
    %c0_1 = arith.constant 0 : index
    %c0_2 = arith.constant 0 : index
    %2 = vector.load %arg2[%c0_1, %c0_2] : memref<16x32xbf16, #tpu.memory_space<vmem>>, vector<16x32xbf16>
    %cst = arith.constant dense<0.000000e+00> : vector<8x32xf32>
    %3 = tpu.matmul %1, %2, %cst {dimension_numbers = #tpu.dot_dimension_numbers<[1], [0], [0], [1], [0, 0, 1, 1], [], []>} : vector<8x16xbf16>, vector<16x32xbf16>, vector<8x32xf32> -> vector<8x32xf32>
    %c0_3 = arith.constant 0 : index
    %c0_4 = arith.constant 0 : index
    %4 = vector.load %arg3[%c0_3, %c0_4] : memref<1x32xf32, #tpu.memory_space<vmem>>, vector<1x32xf32>
    %5 = vector.broadcast %4 : vector<1x32xf32> to vector<8x32xf32>
    %6 = arith.addf %3, %5 : vector<8x32xf32>
    %cst_5 = arith.constant 0.000000e+00 : f32
    %7 = vector.broadcast %cst_5 : f32 to vector<8x32xf32>
    %8 = arith.maximumf %6, %7 : vector<8x32xf32>
    %9 = arith.truncf %8 : vector<8x32xf32> to vector<8x32xbf16>
    %c0_6 = arith.constant 0 : index
    %c0_7 = arith.constant 0 : index
    %10 = vector.load %arg4[%c0_6, %c0_7] : memref<32x8xbf16, #tpu.memory_space<vmem>>, vector<32x8xbf16>
    %cst_8 = arith.constant dense<0.000000e+00> : vector<8x8xf32>
    %11 = tpu.matmul %9, %10, %cst_8 {dimension_numbers = #tpu.dot_dimension_numbers<[1], [0], [0], [1], [0, 0, 1, 1], [], []>} : vector<8x32xbf16>, vector<32x8xbf16>, vector<8x8xf32> -> vector<8x8xf32>
    %c0_9 = arith.constant 0 : index
    %c0_10 = arith.constant 0 : index
    %12 = vector.load %arg5[%c0_9, %c0_10] : memref<1x8xf32, #tpu.memory_space<vmem>>, vector<1x8xf32>
    %13 = vector.broadcast %12 : vector<1x8xf32> to vector<8x8xf32>
    %14 = arith.addf %11, %13 : vector<8x8xf32>
    %c0_11 = arith.constant 0 : index
    %c0_12 = arith.constant 0 : index
    %15 = vector.load %arg6[%c0_11, %c0_12] : memref<8x8xf32, #tpu.memory_space<vmem>>, vector<8x8xf32>
    tpu.vector_store %arg6[%c0_11, %c0_12], %14 {strides = array<i32>} : memref<8x8xf32, #tpu.memory_space<vmem>>, vector<8x8xf32>,
    return
  }
  func.func @transform_0(%arg0: i32) -> (i32, i32) {
    %c0_i32 = arith.constant 0 : i32
    %c0_i32_0 = arith.constant 0 : i32
    return %arg0, %c0_i32 : i32, i32
  }
  func.func @transform_1(%arg0: i32) -> (i32, i32) {
    %c0_i32 = arith.constant 0 : i32
    %c0_i32_0 = arith.constant 0 : i32
    %c0_i32_1 = arith.constant 0 : i32
    return %c0_i32, %c0_i32_0 : i32, i32
  }
  func.func @transform_2(%arg0: i32) -> (i32, i32) {
    %c0_i32 = arith.constant 0 : i32
    %c0_i32_0 = arith.constant 0 : i32
    %c0_i32_1 = arith.constant 0 : i32
    return %c0_i32, %c0_i32_0 : i32, i32
  }
  func.func @transform_3(%arg0: i32) -> (i32, i32) {
    %c0_i32 = arith.constant 0 : i32
    %c0_i32_0 = arith.constant 0 : i32
    %c0_i32_1 = arith.constant 0 : i32
    return %c0_i32, %c0_i32_0 : i32, i32
  }
  func.func @transform_4(%arg0: i32) -> (i32, i32) {
    %c0_i32 = arith.constant 0 : i32
    %c0_i32_0 = arith.constant 0 : i32
    %c0_i32_1 = arith.constant 0 : i32
    return %c0_i32, %c0_i32_0 : i32, i32
  }
  func.func @transform_5(%arg0: i32) -> (i32, i32) {
    %c0_i32 = arith.constant 0 : i32
    %c0_i32_0 = arith.constant 0 : i32
    return %arg0, %c0_i32 : i32, i32
  }
}

module attributes {stable_mosaic.version = 11 : i64} {
  func.func @_mlp_kernel(%arg0: i32, %arg1: memref<8x16xf32, #tpu.memory_space<vmem>>, %arg2: memref<16x32xbf16, #tpu.memory_space<vmem>>, %arg3: memref<1x32xf32, #tpu.memory_space<vmem>>, %arg4: memref<32x8xbf16, #tpu.memory_space<vmem>>, %arg5: memref<1x8xf32, #tpu.memory_space<vmem>>, %arg6: memref<8x8xf32, #tpu.memory_space<vmem>>) attributes {dimension_semantics = [#tpu.dimension_semantics<parallel>], iteration_bounds = array<i64: 2>, scalar_prefetch = 0 : i64, scratch_operands = 0 : i64, tpu.core_type = #tpu.core_type<tc>, window_params = [{transform_indices = @transform_0, window_bounds = array<i64: 8, 16>}, {pipeline_mode = #tpu.pipeline_mode<synchronous>, transform_indices = @transform_1, window_bounds = array<i64: 16, 32>}, {pipeline_mode = #tpu.pipeline_mode<synchronous>, transform_indices = @transform_2, window_bounds = array<i64: 1, 32>}, {pipeline_mode = #tpu.pipeline_mode<synchronous>, transform_indices = @transform_3, window_bounds = array<i64: 32, 8>}, {pipeline_mode = #tpu.pipeline_mode<synchronous>, transform_indices = @transform_4, window_bounds = array<i64: 1, 8>}, {transform_indices = @transform_5, window_bounds = array<i64: 8, 8>}]} {
    %c0 = arith.constant 0 : index
    %c0_0 = arith.constant 0 : index
    %0 = vector.load %arg1[%c0, %c0_0] : memref<8x16xf32, #tpu.memory_space<vmem>>, vector<8x16xf32>
    %1 = arith.truncf %0 : vector<8x16xf32> to vector<8x16xbf16>
    %c0_1 = arith.constant 0 : index
    %c0_2 = arith.constant 0 : index
    %2 = vector.load %arg2[%c0_1, %c0_2] : memref<16x32xbf16, #tpu.memory_space<vmem>>, vector<16x32xbf16>
    %cst = arith.constant dense<0.000000e+00> : vector<8x32xf32>
    %3 = tpu.matmul %1, %2, %cst {dimension_numbers = #tpu.dot_dimension_numbers<[1], [0], [0], [1], [0, 0, 1, 1], [], []>} : vector<8x16xbf16>, vector<16x32xbf16>, vector<8x32xf32> -> vector<8x32xf32>
    %c0_3 = arith.constant 0 : index
    %c0_4 = arith.constant 0 : index
    %4 = vector.load %arg3[%c0_3, %c0_4] : memref<1x32xf32, #tpu.memory_space<vmem>>, vector<1x32xf32>
    %5 = vector.broadcast %4 : vector<1x32xf32> to vector<8x32xf32>
    %6 = arith.addf %3, %5 : vector<8x32xf32>
    %cst_5 = arith.constant 0.000000e+00 : f32
    %7 = vector.broadcast %cst_5 : f32 to vector<8x32xf32>
    %8 = arith.maximumf %6, %7 : vector<8x32xf32>
    %9 = arith.truncf %8 : vector<8x32xf32> to vector<8x32xbf16>
    %c0_6 = arith.constant 0 : index
    %c0_7 = arith.constant 0 : index
    %10 = vector.load %arg4[%c0_6, %c0_7] : memref<32x8xbf16, #tpu.memory_space<vmem>>, vector<32x8xbf16>
    %cst_8 = arith.constant dense<0.000000e+00> : vector<8x8xf32>
    %11 = tpu.matmul %9, %10, %cst_8 {dimension_numbers = #tpu.dot_dimension_numbers<[1], [0], [0], [1], [0, 0, 1, 1], [], []>} : vector<8x32xbf16>, vector<32x8xbf16>, vector<8x8xf32> -> vector<8x8xf32>
    %c0_9 = arith.constant 0 : index
    %c0_10 = arith.constant 0 : index
    %12 = vector.load %arg5[%c0_9, %c0_10] : memref<1x8xf32, #tpu.memory_space<vmem>>, vector<1x8xf32>
    %13 = vector.broadcast %12 : vector<1x8xf32> to vector<8x8xf32>
    %14 = arith.addf %11, %13 : vector<8x8xf32>
    %c0_11 = arith.constant 0 : index
    %c0_12 = arith.constant 0 : index
    %15 = vector.load %arg6[%c0_11, %c0_12] : memref<8x8xf32, #tpu.memory_space<vmem>>, vector<8x8xf32>
    tpu.vector_store %arg6[%c0_11, %c0_12], %14 {strides = array<i32>} : memref<8x8xf32, #tpu.memory_space<vmem>>, vector<8x8xf32>,
    return
  }
  func.func @transform_0(%arg0: i32) -> (i32, i32) {
    %c0_i32 = arith.constant 0 : i32
    %c0_i32_0 = arith.constant 0 : i32
    return %arg0, %c0_i32 : i32, i32
  }
  func.func @transform_1(%arg0: i32) -> (i32, i32) {
    %c0_i32 = arith.constant 0 : i32
    %c0_i32_0 = arith.constant 0 : i32
    %c0_i32_1 = arith.constant 0 : i32
    return %c0_i32, %c0_i32_0 : i32, i32
  }
  func.func @transform_2(%arg0: i32) -> (i32, i32) {
    %c0_i32 = arith.constant 0 : i32
    %c0_i32_0 = arith.constant 0 : i32
    %c0_i32_1 = arith.constant 0 : i32
    return %c0_i32, %c0_i32_0 : i32, i32
  }
  func.func @transform_3(%arg0: i32) -> (i32, i32) {
    %c0_i32 = arith.constant 0 : i32
    %c0_i32_0 = arith.constant 0 : i32
    %c0_i32_1 = arith.constant 0 : i32
    return %c0_i32, %c0_i32_0 : i32, i32
  }
  func.func @transform_4(%arg0: i32) -> (i32, i32) {
    %c0_i32 = arith.constant 0 : i32
    %c0_i32_0 = arith.constant 0 : i32
    %c0_i32_1 = arith.constant 0 : i32
    return %c0_i32, %c0_i32_0 : i32, i32
  }
  func.func @transform_5(%arg0: i32) -> (i32, i32) {
    %c0_i32 = arith.constant 0 : i32
    %c0_i32_0 = arith.constant 0 : i32
    return %arg0, %c0_i32 : i32, i32
  }
}

</mosaic_0001>

<llo_original>
// kernel: meta_learning_mlp.1
$region0: #{meta_learning_mlp.1}
  #allocation0 [shape = 'u32[]', space=smem, size = 0x4, offset = 0x4, fixed_abs, tag = 'smem constant byte address 0x4 - core index']
  #allocation1 [shape = 'u32[144,128]{1,0:T(1,128)}', space=vmem, size = 0x12000, scoped, tag = 'internal scratch']
  %s0 = inlined_call_operand.vmem [shape: f32[16,16], index: 0, kind: input, shape index: {}]
  %s1 = inlined_call_operand.vmem [shape: bf16[16,32], index: 1, kind: input, shape index: {}]
  %s2 = inlined_call_operand.vmem [shape: f32[1,32], index: 2, kind: input, shape index: {}]
  %s3 = inlined_call_operand.vmem [shape: bf16[32,8], index: 3, kind: input, shape index: {}]
  %s4 = inlined_call_operand.vmem [shape: f32[1,8], index: 4, kind: input, shape index: {}]
  %s5 = inlined_call_operand.vmem [shape: f32[16,8], index: 5, kind: output, shape index: {}]
  %s6 = sld [smem:[#allocation0]]
  $region53: #{meta_learning_mlp.1} parent=0
    _
  %s8 = ssub.s32 1, %s6
  %s9 = scalar_select 0, %s8, %s6
  loop: start=0, step=1, limit=4
  $region2: #{meta_learning_mlp.1} parent=0 // loop_pre_header
    _
  $region3: #{meta_learning_mlp.1} parent=0 // loop_header
    %s11 = sphi 0, %s15
    %p12 = scmp.ge.s32.totalorder %s11, 4
    %s21 = sphi 0, %s23
    %s24 = sphi 0, %s21
    %s25 = sphi 0, %s24
    %s41 = sphi 0, %s25
    %s45 = sphi 0, %s45
    %s47 = sphi 0, %s45
    %s48 = sphi 0, %s47
    %s62 = sphi 0, %s48
    %s66 = sphi 0, %s66
    %s68 = sphi 0, %s66
    %s69 = sphi 0, %s68
    %s83 = sphi 0, %s69
    %s87 = sphi 0, %s87
    %s89 = sphi 0, %s87
    %s90 = sphi 0, %s89
    %s104 = sphi 0, %s90
    %s108 = sphi 0, %s108
    %s110 = sphi 0, %s108
    %s111 = sphi 0, %s110
    %s125 = sphi 0, %s111
    %s131 = sphi 0, %s133
    %s134 = sphi 0, %s131
    %s135 = sphi 0, %s134
    %s151 = sphi 0, %s135
  $region4: #{meta_learning_mlp.1} parent=0 // loop_header_branch
    %14 = sbr.rel (%p12) target = $region8
  $region5: #{meta_learning_mlp.1} parent=0 // loop_body
    %s16 = ssub.s32 %s11, 1
    %s17 = ssub.s32 %s11, 2
    %s18 = sadd.s32 %s11, 1
    %s19 = ssub.s32 %s11, %s18
    %p20 = scmp.eq.s32.totalorder %s19, 0
    %s22 = sadd.s32 %s21, 1
    %s23 = scalar_select %p20, %s21, %s22
    %p26 = pneg %p20
    %p27 = scmp.eq.s32.totalorder %s11, 1
    %p28 = por %p26, %p27
    %p29 = scmp.ne.s32.totalorder %s21, %s24
    %p30 = scmp.eq.s32.totalorder %s11, 0
    %p31 = por %p29, %p30
    %p32 = scmp.ne.s32.totalorder %s21, %s24
    %p33 = scmp.eq.s32.totalorder %s16, 1
    %p34 = por %p32, %p33
    %p35 = scmp.ne.s32.totalorder %s24, %s25
    %p36 = scmp.eq.s32.totalorder %s16, 0
    %p37 = por %p35, %p36
    %p38 = scmp.ne.s32.totalorder %s24, %s25
    %p39 = scmp.eq.s32.totalorder %s17, 1
    %p40 = por %p38, %p39
    %p42 = scmp.ne.s32.totalorder %s25, %s41
    %p43 = scmp.eq.s32.totalorder %s17, 0
    %p44 = por %p42, %p43
    %s46 = sadd.s32 %s45, 1
    %p49 = scmp.eq.s32.totalorder %s11, 1
    %p50 = scmp.ne.s32.totalorder %s45, %s47
    %p51 = scmp.eq.s32.totalorder %s11, 0
    %p52 = por %p50, %p51
    %p53 = scmp.ne.s32.totalorder %s45, %s47
    %p54 = scmp.eq.s32.totalorder %s16, 1
    %p55 = por %p53, %p54
    %p56 = scmp.ne.s32.totalorder %s47, %s48
    %p57 = scmp.eq.s32.totalorder %s16, 0
    %p58 = por %p56, %p57
    %p59 = scmp.ne.s32.totalorder %s47, %s48
    %p60 = scmp.eq.s32.totalorder %s17, 1
    %p61 = por %p59, %p60
    %p63 = scmp.ne.s32.totalorder %s48, %s62
    %p64 = scmp.eq.s32.totalorder %s17, 0
    %p65 = por %p63, %p64
    %s67 = sadd.s32 %s66, 1
    %p70 = scmp.eq.s32.totalorder %s11, 1
    %p71 = scmp.ne.s32.totalorder %s66, %s68
    %p72 = scmp.eq.s32.totalorder %s11, 0
    %p73 = por %p71, %p72
    %p74 = scmp.ne.s32.totalorder %s66, %s68
    %p75 = scmp.eq.s32.totalorder %s16, 1
    %p76 = por %p74, %p75
    %p77 = scmp.ne.s32.totalorder %s68, %s69
    %p78 = scmp.eq.s32.totalorder %s16, 0
    %p79 = por %p77, %p78
    %p80 = scmp.ne.s32.totalorder %s68, %s69
    %p81 = scmp.eq.s32.totalorder %s17, 1
    %p82 = por %p80, %p81
    %p84 = scmp.ne.s32.totalorder %s69, %s83
    %p85 = scmp.eq.s32.totalorder %s17, 0
    %p86 = por %p84, %p85
    %s88 = sadd.s32 %s87, 1
    %p91 = scmp.eq.s32.totalorder %s11, 1
    %p92 = scmp.ne.s32.totalorder %s87, %s89
    %p93 = scmp.eq.s32.totalorder %s11, 0
    %p94 = por %p92, %p93
    %p95 = scmp.ne.s32.totalorder %s87, %s89
    %p96 = scmp.eq.s32.totalorder %s16, 1
    %p97 = por %p95, %p96
    %p98 = scmp.ne.s32.totalorder %s89, %s90
    %p99 = scmp.eq.s32.totalorder %s16, 0
    %p100 = por %p98, %p99
    %p101 = scmp.ne.s32.totalorder %s89, %s90
    %p102 = scmp.eq.s32.totalorder %s17, 1
    %p103 = por %p101, %p102
    %p105 = scmp.ne.s32.totalorder %s90, %s104
    %p106 = scmp.eq.s32.totalorder %s17, 0
    %p107 = por %p105, %p106
    %s109 = sadd.s32 %s108, 1
    %p112 = scmp.eq.s32.totalorder %s11, 1
    %p113 = scmp.ne.s32.totalorder %s108, %s110
    %p114 = scmp.eq.s32.totalorder %s11, 0
    %p115 = por %p113, %p114
    %p116 = scmp.ne.s32.totalorder %s108, %s110
    %p117 = scmp.eq.s32.totalorder %s16, 1
    %p118 = por %p116, %p117
    %p119 = scmp.ne.s32.totalorder %s110, %s111
    %p120 = scmp.eq.s32.totalorder %s16, 0
    %p121 = por %p119, %p120
    %p122 = scmp.ne.s32.totalorder %s110, %s111
    %p123 = scmp.eq.s32.totalorder %s17, 1
    %p124 = por %p122, %p123
    %p126 = scmp.ne.s32.totalorder %s111, %s125
    %p127 = scmp.eq.s32.totalorder %s17, 0
    %p128 = por %p126, %p127
    %s129 = ssub.s32 %s11, %s18
    %p130 = scmp.eq.s32.totalorder %s129, 0
    %s132 = sadd.s32 %s131, 1
    %s133 = scalar_select %p130, %s131, %s132
    %p136 = pneg %p130
    %p137 = scmp.eq.s32.totalorder %s11, 1
    %p138 = por %p136, %p137
    %p139 = scmp.ne.s32.totalorder %s131, %s134
    %p140 = scmp.eq.s32.totalorder %s11, 0
    %p141 = por %p139, %p140
    %p142 = scmp.ne.s32.totalorder %s131, %s134
    %p143 = scmp.eq.s32.totalorder %s16, 1
    %p144 = por %p142, %p143
    %p145 = scmp.ne.s32.totalorder %s134, %s135
    %p146 = scmp.eq.s32.totalorder %s16, 0
    %p147 = por %p145, %p146
    %p148 = scmp.ne.s32.totalorder %s134, %s135
    %p149 = scmp.eq.s32.totalorder %s17, 1
    %p150 = por %p148, %p149
    %p152 = scmp.ne.s32.totalorder %s135, %s151
    %p153 = scmp.eq.s32.totalorder %s17, 0
    %p154 = por %p152, %p153
    %p155 = scmp.le.s32.totalorder 1, %s11
    %p156 = scmp.lt.s32.totalorder %s11, 3
    %p157 = pnand %p155, %p156
    %p158 = pneg %p157
    // Predicated region
    $region9: #{meta_learning_mlp.1} parent=5 // pred_check
      _
    $region10: #{meta_learning_mlp.1} parent=5 // pred_check_branch
      %160 = sbr.rel (%p157) target = $region12
    $region11: #{meta_learning_mlp.1} parent=5 // pred_region
      %s161 = ssub.s32 %s11, 1
      // Predicated region
      $region13: #{meta_learning_mlp.1} parent=11 // pred_check
        %p162 = pneg %p58
      $region14: #{meta_learning_mlp.1} parent=11 // pred_check_branch
        %164 = sbr.rel (%p162) target = $region16
      $region15: #{meta_learning_mlp.1} parent=11 // pred_region
        _
      $region16: #{meta_learning_mlp.1} parent=11 // pred_fallthru
        _
      // Predicated region
      $region17: #{meta_learning_mlp.1} parent=11 // pred_check
        %p165 = pneg %p79
      $region18: #{meta_learning_mlp.1} parent=11 // pred_check_branch
        %167 = sbr.rel (%p165) target = $region20
      $region19: #{meta_learning_mlp.1} parent=11 // pred_region
        _
      $region20: #{meta_learning_mlp.1} parent=11 // pred_fallthru
        _
      // Predicated region
      $region21: #{meta_learning_mlp.1} parent=11 // pred_check
        %p168 = pneg %p100
      $region22: #{meta_learning_mlp.1} parent=11 // pred_check_branch
        %170 = sbr.rel (%p168) target = $region24
      $region23: #{meta_learning_mlp.1} parent=11 // pred_region
        _
      $region24: #{meta_learning_mlp.1} parent=11 // pred_fallthru
        _
      // Predicated region
      $region25: #{meta_learning_mlp.1} parent=11 // pred_check
        %p171 = pneg %p121
      $region26: #{meta_learning_mlp.1} parent=11 // pred_check_branch
        %173 = sbr.rel (%p171) target = $region28
      $region27: #{meta_learning_mlp.1} parent=11 // pred_region
        _
      $region28: #{meta_learning_mlp.1} parent=11 // pred_fallthru
        _
    $region12: #{meta_learning_mlp.1} parent=5 // pred_fallthru
      _
    %p174 = scmp.lt.s32.totalorder %s11, 2
    // Predicated region
    $region29: #{meta_learning_mlp.1} parent=5 // pred_check
      %p175 = pneg %p174
    $region30: #{meta_learning_mlp.1} parent=5 // pred_check_branch
      %177 = sbr.rel (%p175) target = $region32
    $region31: #{meta_learning_mlp.1} parent=5 // pred_region
      // Predicated region
      $region33: #{meta_learning_mlp.1} parent=31 // pred_check
        %p178 = pneg %p31
      $region34: #{meta_learning_mlp.1} parent=31 // pred_check_branch
        %180 = sbr.rel (%p178) target = $region36
      $region35: #{meta_learning_mlp.1} parent=31 // pred_region
        %p181 = scmp.lt.s32.totalorder %s11, 1
        %s182 = scalar_select %p181, %s11, 1
        %s183 = smul.addr %s182, 8
        %s184 = scalar_lea.vmem %s0, %s183
      $region36: #{meta_learning_mlp.1} parent=31 // pred_fallthru
        _
    $region32: #{meta_learning_mlp.1} parent=5 // pred_fallthru
      _
    %p185 = scmp.le.s32.totalorder 1, %s11
    %p186 = scmp.lt.s32.totalorder %s11, 3
    %p187 = pnand %p185, %p186
    %p188 = pneg %p187
    // Predicated region
    $region37: #{meta_learning_mlp.1} parent=5 // pred_check
      _
    $region38: #{meta_learning_mlp.1} parent=5 // pred_check_branch
      %190 = sbr.rel (%p187) target = $region40
    $region39: #{meta_learning_mlp.1} parent=5 // pred_region
      %s191 = ssub.s32 %s11, 1
      %p192 = scmp.lt.s32.totalorder %s16, 1
      %s193 = scalar_select %p192, %s16, 1
      %s194 = smul.addr %s193, 8
      %s195 = scalar_lea.vmem %s0, %s194
      %p196 = pneg %p37
      %p197 = pneg %p34
      %p198 = pneg %p58
      %p199 = pneg %p55
      %p200 = pneg %p79
      %p201 = pneg %p76
      %p202 = pneg %p100
      %p203 = pneg %p97
      %p204 = pneg %p121
      %p205 = pneg %p118
      %p206 = pneg %p147
      %p207 = pneg %p144
      %p208 = scmp.lt.s32.totalorder %s16, 1
      %s209 = scalar_select %p208, %s16, 1
      %s210 = smul.addr %s209, 8
      %s211 = scalar_lea.vmem %s5, %s210
      %p212 = scmp.lt.s32.totalorder %s16, 1
      %s213 = scalar_select %p212, %s16, 1
      %s214 = smul.addr %s213, 8
      %s215 = scalar_lea.vmem %s0, %s214
      %p216 = scmp.lt.s32.totalorder %s16, 1
      %s217 = scalar_select %p216, %s16, 1
      %s218 = smul.addr %s217, 8
      %s219 = scalar_lea.vmem %s5, %s218
      %v221 = vld [vmem:[%s215] sm:$0xff]
      %v222 = vpack.c.bf16 %v221, %v221
      %v223 = vld [vmem:[%s1] sm:$0xf]
      %v224 = vld [vmem:[%s1 + $0x4] sm:$0xf]
      %v225 = vld [vmem:[%s2] sm:$0x1]
      %v227 = vlaneseq
      %v228 = vshrl.u32 %v227, 7
      %v229 = vsub.s32 0, %v228
      %v230 = vrot.slane %v225, %v229
      %v234 = vunpack.c.l.b16 %v223
      %v235 = vunpack.c.l.b16 %v224
      %v236 = vpack.c.b16 %v235, %v234
      %vm238 = vcmask 130048
      %v240 = vsel %vm238, %v222, 0
      %242 = vmatprep.subr.bf16.mxu0 0
      %243 = vmatpush1.bf16.msra.mxu0 0
      %244 = vmatprep.subr.bf16.mxu0 0
      %245 = vmatpush1.bf16.msra.mxu0 0
      %246 = vmatprep.subr.bf16.mxu0 0
      %247 = vmatpush1.bf16.msra.mxu0 0
      %248 = vmatprep.subr.bf16.mxu0 0
      %249 = vmatpush1.bf16.msra.mxu0 0
      %250 = vmatprep.subr.bf16.mxu0 0
      %251 = vmatpush1.bf16.msra.mxu0 0
      %252 = vmatprep.subr.bf16.mxu0 0
      %253 = vmatpush1.bf16.msra.mxu0 0
      %254 = vmatprep.subr.bf16.mxu0 0
      %255 = vmatpush1.bf16.msra.mxu0 0
      %256 = vmatprep.subr.bf16.mxu0 0
      %257 = vmatpush1.bf16.msra.mxu0 %v236
      %258 = vmatprep.subr.bf16.mxu0 0
      %259 = vmatpush2.bf16.msra.mxu0 0
      %260 = vmatprep.subr.bf16.mxu0 0
      %261 = vmatpush2.bf16.msra.mxu0 0
      %262 = vmatprep.subr.bf16.mxu0 0
      %263 = vmatpush2.bf16.msra.mxu0 0
      %264 = vmatprep.subr.bf16.mxu0 0
      %265 = vmatpush2.bf16.msra.mxu0 0
      %266 = vmatprep.subr.bf16.mxu0 0
      %267 = vmatpush2.bf16.msra.mxu0 0
      %268 = vmatprep.subr.bf16.mxu0 0
      %269 = vmatpush2.bf16.msra.mxu0 0
      %270 = vmatprep.subr.bf16.mxu0 0
      %271 = vmatpush2.bf16.msra.mxu0 0
      %272 = vmatprep.subr.bf16.mxu0 0
      %273 = vmatpush2.bf16.msra.mxu0 0
      %274 = vmatprep.mubr.bf16.mxu0 0
      %275 = vmatmul.mubr.bf16.gmra.mxu0 %v240
      %v276 = vpop.f32.mrf.mxu0
      %v277 = vadd.f32 %v230, %v276
      %v278 = vpop.f32.mrf.mxu0
      %v279 = vpop.f32.mrf.mxu0
      %v280 = vpop.f32.mrf.mxu0
      %281 = vdwg.mxu0
      %v282 = vmax.f32 %v277, 0.0
      %v283 = vpack.c.bf16 %v282, %v282
      %v284 = vld [vmem:[%s3] sm:$0xf]
      %v285 = vld [vmem:[%s3 + $0x4] sm:$0xf]
      %v286 = vld [vmem:[%s3 + $0x8] sm:$0xf]
      %v287 = vld [vmem:[%s3 + $0xc] sm:$0xf]
      %v288 = vld [vmem:[%s4] sm:$0x1]
      %v290 = vlaneseq
      %v291 = vshrl.u32 %v290, 7
      %v292 = vsub.s32 0, %v291
      %v293 = vrot.slane %v288, %v292
      %v299 = vunpack.c.l.b16 %v284
      %v300 = vunpack.c.l.b16 %v285
      %v301 = vunpack.c.l.b16 %v286
      %v302 = vunpack.c.l.b16 %v287
      %v303 = vpack.c.b16 %v300, %v299
      %v304 = vpack.c.b16 %v302, %v301
      %vm307 = vcmask 261120
      %v309 = vsel %vm307, %v283, 0
      %311 = vmatprep.subr.bf16.mxu0 0
      %312 = vmatpush1.bf16.msra.mxu0 0
      %313 = vmatprep.subr.bf16.mxu0 0
      %314 = vmatpush1.bf16.msra.mxu0 0
      %315 = vmatprep.subr.bf16.mxu0 0
      %316 = vmatpush1.bf16.msra.mxu0 0
      %317 = vmatprep.subr.bf16.mxu0 0
      %318 = vmatpush1.bf16.msra.mxu0 0
      %319 = vmatprep.subr.bf16.mxu0 0
      %320 = vmatpush1.bf16.msra.mxu0 0
      %321 = vmatprep.subr.bf16.mxu0 0
      %322 = vmatpush1.bf16.msra.mxu0 0
      %323 = vmatprep.subr.bf16.mxu0 0
      %324 = vmatpush1.bf16.msra.mxu0 %v304
      %325 = vmatprep.subr.bf16.mxu0 0
      %326 = vmatpush1.bf16.msra.mxu0 %v303
      %327 = vmatprep.subr.bf16.mxu0 0
      %328 = vmatpush2.bf16.msra.mxu0 0
      %329 = vmatprep.subr.bf16.mxu0 0
      %330 = vmatpush2.bf16.msra.mxu0 0
      %331 = vmatprep.subr.bf16.mxu0 0
      %332 = vmatpush2.bf16.msra.mxu0 0
      %333 = vmatprep.subr.bf16.mxu0 0
      %334 = vmatpush2.bf16.msra.mxu0 0
      %335 = vmatprep.subr.bf16.mxu0 0
      %336 = vmatpush2.bf16.msra.mxu0 0
      %337 = vmatprep.subr.bf16.mxu0 0
      %338 = vmatpush2.bf16.msra.mxu0 0
      %339 = vmatprep.subr.bf16.mxu0 0
      %340 = vmatpush2.bf16.msra.mxu0 0
      %341 = vmatprep.subr.bf16.mxu0 0
      %342 = vmatpush2.bf16.msra.mxu0 0
      %343 = vmatprep.mubr.bf16.mxu0 0
      %344 = vmatmul.mubr.bf16.gmra.mxu0 %v309
      %v345 = vpop.f32.mrf.mxu0
      %v346 = vadd.f32 %v293, %v345
      %v347 = vpop.f32.mrf.mxu0
      %v348 = vpop.f32.mrf.mxu0
      %v349 = vpop.f32.mrf.mxu0
      %350 = vdwg.mxu0
      %vm351 = vcmask 64512
      %352 = vst.msk [vmem:[%s219] sm:$0xff] %vm351, %v346
      %p353 = scmp.lt.s32.totalorder %s16, 1
      %s354 = scalar_select %p353, %s16, 1
      %s355 = smul.addr %s354, 8
      %s356 = scalar_lea.vmem %s5, %s355
      // Predicated region
      $region41: #{meta_learning_mlp.1} parent=39 // pred_check
        %p357 = pneg %p144
      $region42: #{meta_learning_mlp.1} parent=39 // pred_check_branch
        %359 = sbr.rel (%p357) target = $region44
      $region43: #{meta_learning_mlp.1} parent=39 // pred_region
        _
      $region44: #{meta_learning_mlp.1} parent=39 // pred_fallthru
        _
    $region40: #{meta_learning_mlp.1} parent=5 // pred_fallthru
      _
    %p360 = scmp.le.s32.totalorder 2, %s11
    // Predicated region
    $region45: #{meta_learning_mlp.1} parent=5 // pred_check
      %p361 = pneg %p360
    $region46: #{meta_learning_mlp.1} parent=5 // pred_check_branch
      %363 = sbr.rel (%p361) target = $region48
    $region47: #{meta_learning_mlp.1} parent=5 // pred_region
      %s364 = ssub.s32 %s11, 2
      // Predicated region
      $region49: #{meta_learning_mlp.1} parent=47 // pred_check
        %p365 = pneg %p150
      $region50: #{meta_learning_mlp.1} parent=47 // pred_check_branch
        %367 = sbr.rel (%p365) target = $region52
      $region51: #{meta_learning_mlp.1} parent=47 // pred_region
        %p368 = scmp.lt.s32.totalorder %s17, 1
        %s369 = scalar_select %p368, %s17, 1
        %s370 = smul.addr %s369, 8
        %s371 = scalar_lea.vmem %s5, %s370
      $region52: #{meta_learning_mlp.1} parent=47 // pred_fallthru
        _
    $region48: #{meta_learning_mlp.1} parent=5 // pred_fallthru
      _
  $region6: #{meta_learning_mlp.1} parent=0 // loop_footer
    %s15 = sadd.s32 1, %s11
  $region7: #{meta_learning_mlp.1} parent=0 // loop_footer_branch
    %10 = sbr.rel target = $region3
  $region8: #{meta_learning_mlp.1} parent=0 // loop_exit
    _

// kernel: meta_learning_mlp.1
$region0: #{meta_learning_mlp.1}
  #allocation0 [shape = 'u32[]', space=smem, size = 0x4, offset = 0x4, fixed_abs, tag = 'smem constant byte address 0x4 - core index']
  #allocation1 [shape = 'u32[144,128]{1,0:T(1,128)}', space=vmem, size = 0x12000, scoped, tag = 'internal scratch']
  %s0 = inlined_call_operand.vmem [shape: f32[16,16], index: 0, kind: input, shape index: {}]
  %s1 = inlined_call_operand.vmem [shape: bf16[16,32], index: 1, kind: input, shape index: {}]
  %s2 = inlined_call_operand.vmem [shape: f32[1,32], index: 2, kind: input, shape index: {}]
  %s3 = inlined_call_operand.vmem [shape: bf16[32,8], index: 3, kind: input, shape index: {}]
  %s4 = inlined_call_operand.vmem [shape: f32[1,8], index: 4, kind: input, shape index: {}]
  %s5 = inlined_call_operand.vmem [shape: f32[16,8], index: 5, kind: output, shape index: {}]
  %s6 = sld [smem:[#allocation0]]
  $region53: #{meta_learning_mlp.1} parent=0
    _
  %s8 = ssub.s32 1, %s6
  %s9 = scalar_select 0, %s8, %s6
  loop: start=0, step=1, limit=4
  $region2: #{meta_learning_mlp.1} parent=0 // loop_pre_header
    _
  $region3: #{meta_learning_mlp.1} parent=0 // loop_header
    %s11 = sphi 0, %s15
    %p12 = scmp.ge.s32.totalorder %s11, 4
    %s21 = sphi 0, %s23
    %s24 = sphi 0, %s21
    %s25 = sphi 0, %s24
    %s41 = sphi 0, %s25
    %s45 = sphi 0, %s45
    %s47 = sphi 0, %s45
    %s48 = sphi 0, %s47
    %s62 = sphi 0, %s48
    %s66 = sphi 0, %s66
    %s68 = sphi 0, %s66
    %s69 = sphi 0, %s68
    %s83 = sphi 0, %s69
    %s87 = sphi 0, %s87
    %s89 = sphi 0, %s87
    %s90 = sphi 0, %s89
    %s104 = sphi 0, %s90
    %s108 = sphi 0, %s108
    %s110 = sphi 0, %s108
    %s111 = sphi 0, %s110
    %s125 = sphi 0, %s111
    %s131 = sphi 0, %s133
    %s134 = sphi 0, %s131
    %s135 = sphi 0, %s134
    %s151 = sphi 0, %s135
  $region4: #{meta_learning_mlp.1} parent=0 // loop_header_branch
    %14 = sbr.rel (%p12) target = $region8
  $region5: #{meta_learning_mlp.1} parent=0 // loop_body
    %s16 = ssub.s32 %s11, 1
    %s17 = ssub.s32 %s11, 2
    %s18 = sadd.s32 %s11, 1
    %s19 = ssub.s32 %s11, %s18
    %p20 = scmp.eq.s32.totalorder %s19, 0
    %s22 = sadd.s32 %s21, 1
    %s23 = scalar_select %p20, %s21, %s22
    %p26 = pneg %p20
    %p27 = scmp.eq.s32.totalorder %s11, 1
    %p28 = por %p26, %p27
    %p29 = scmp.ne.s32.totalorder %s21, %s24
    %p30 = scmp.eq.s32.totalorder %s11, 0
    %p31 = por %p29, %p30
    %p32 = scmp.ne.s32.totalorder %s21, %s24
    %p33 = scmp.eq.s32.totalorder %s16, 1
    %p34 = por %p32, %p33
    %p35 = scmp.ne.s32.totalorder %s24, %s25
    %p36 = scmp.eq.s32.totalorder %s16, 0
    %p37 = por %p35, %p36
    %p38 = scmp.ne.s32.totalorder %s24, %s25
    %p39 = scmp.eq.s32.totalorder %s17, 1
    %p40 = por %p38, %p39
    %p42 = scmp.ne.s32.totalorder %s25, %s41
    %p43 = scmp.eq.s32.totalorder %s17, 0
    %p44 = por %p42, %p43
    %s46 = sadd.s32 %s45, 1
    %p49 = scmp.eq.s32.totalorder %s11, 1
    %p50 = scmp.ne.s32.totalorder %s45, %s47
    %p51 = scmp.eq.s32.totalorder %s11, 0
    %p52 = por %p50, %p51
    %p53 = scmp.ne.s32.totalorder %s45, %s47
    %p54 = scmp.eq.s32.totalorder %s16, 1
    %p55 = por %p53, %p54
    %p56 = scmp.ne.s32.totalorder %s47, %s48
    %p57 = scmp.eq.s32.totalorder %s16, 0
    %p58 = por %p56, %p57
    %p59 = scmp.ne.s32.totalorder %s47, %s48
    %p60 = scmp.eq.s32.totalorder %s17, 1
    %p61 = por %p59, %p60
    %p63 = scmp.ne.s32.totalorder %s48, %s62
    %p64 = scmp.eq.s32.totalorder %s17, 0
    %p65 = por %p63, %p64
    %s67 = sadd.s32 %s66, 1
    %p70 = scmp.eq.s32.totalorder %s11, 1
    %p71 = scmp.ne.s32.totalorder %s66, %s68
    %p72 = scmp.eq.s32.totalorder %s11, 0
    %p73 = por %p71, %p72
    %p74 = scmp.ne.s32.totalorder %s66, %s68
    %p75 = scmp.eq.s32.totalorder %s16, 1
    %p76 = por %p74, %p75
    %p77 = scmp.ne.s32.totalorder %s68, %s69
    %p78 = scmp.eq.s32.totalorder %s16, 0
    %p79 = por %p77, %p78
    %p80 = scmp.ne.s32.totalorder %s68, %s69
    %p81 = scmp.eq.s32.totalorder %s17, 1
    %p82 = por %p80, %p81
    %p84 = scmp.ne.s32.totalorder %s69, %s83
    %p85 = scmp.eq.s32.totalorder %s17, 0
    %p86 = por %p84, %p85
    %s88 = sadd.s32 %s87, 1
    %p91 = scmp.eq.s32.totalorder %s11, 1
    %p92 = scmp.ne.s32.totalorder %s87, %s89
    %p93 = scmp.eq.s32.totalorder %s11, 0
    %p94 = por %p92, %p93
    %p95 = scmp.ne.s32.totalorder %s87, %s89
    %p96 = scmp.eq.s32.totalorder %s16, 1
    %p97 = por %p95, %p96
    %p98 = scmp.ne.s32.totalorder %s89, %s90
    %p99 = scmp.eq.s32.totalorder %s16, 0
    %p100 = por %p98, %p99
    %p101 = scmp.ne.s32.totalorder %s89, %s90
    %p102 = scmp.eq.s32.totalorder %s17, 1
    %p103 = por %p101, %p102
    %p105 = scmp.ne.s32.totalorder %s90, %s104
    %p106 = scmp.eq.s32.totalorder %s17, 0
    %p107 = por %p105, %p106
    %s109 = sadd.s32 %s108, 1
    %p112 = scmp.eq.s32.totalorder %s11, 1
    %p113 = scmp.ne.s32.totalorder %s108, %s110
    %p114 = scmp.eq.s32.totalorder %s11, 0
    %p115 = por %p113, %p114
    %p116 = scmp.ne.s32.totalorder %s108, %s110
    %p117 = scmp.eq.s32.totalorder %s16, 1
    %p118 = por %p116, %p117
    %p119 = scmp.ne.s32.totalorder %s110, %s111
    %p120 = scmp.eq.s32.totalorder %s16, 0
    %p121 = por %p119, %p120
    %p122 = scmp.ne.s32.totalorder %s110, %s111
    %p123 = scmp.eq.s32.totalorder %s17, 1
    %p124 = por %p122, %p123
    %p126 = scmp.ne.s32.totalorder %s111, %s125
    %p127 = scmp.eq.s32.totalorder %s17, 0
    %p128 = por %p126, %p127
    %s129 = ssub.s32 %s11, %s18
    %p130 = scmp.eq.s32.totalorder %s129, 0
    %s132 = sadd.s32 %s131, 1
    %s133 = scalar_select %p130, %s131, %s132
    %p136 = pneg %p130
    %p137 = scmp.eq.s32.totalorder %s11, 1
    %p138 = por %p136, %p137
    %p139 = scmp.ne.s32.totalorder %s131, %s134
    %p140 = scmp.eq.s32.totalorder %s11, 0
    %p141 = por %p139, %p140
    %p142 = scmp.ne.s32.totalorder %s131, %s134
    %p143 = scmp.eq.s32.totalorder %s16, 1
    %p144 = por %p142, %p143
    %p145 = scmp.ne.s32.totalorder %s134, %s135
    %p146 = scmp.eq.s32.totalorder %s16, 0
    %p147 = por %p145, %p146
    %p148 = scmp.ne.s32.totalorder %s134, %s135
    %p149 = scmp.eq.s32.totalorder %s17, 1
    %p150 = por %p148, %p149
    %p152 = scmp.ne.s32.totalorder %s135, %s151
    %p153 = scmp.eq.s32.totalorder %s17, 0
    %p154 = por %p152, %p153
    %p155 = scmp.le.s32.totalorder 1, %s11
    %p156 = scmp.lt.s32.totalorder %s11, 3
    %p157 = pnand %p155, %p156
    %p158 = pneg %p157
    // Predicated region
    $region9: #{meta_learning_mlp.1} parent=5 // pred_check
      _
    $region10: #{meta_learning_mlp.1} parent=5 // pred_check_branch
      %160 = sbr.rel (%p157) target = $region12
    $region11: #{meta_learning_mlp.1} parent=5 // pred_region
      %s161 = ssub.s32 %s11, 1
      // Predicated region
      $region13: #{meta_learning_mlp.1} parent=11 // pred_check
        %p162 = pneg %p58
      $region14: #{meta_learning_mlp.1} parent=11 // pred_check_branch
        %164 = sbr.rel (%p162) target = $region16
      $region15: #{meta_learning_mlp.1} parent=11 // pred_region
        _
      $region16: #{meta_learning_mlp.1} parent=11 // pred_fallthru
        _
      // Predicated region
      $region17: #{meta_learning_mlp.1} parent=11 // pred_check
        %p165 = pneg %p79
      $region18: #{meta_learning_mlp.1} parent=11 // pred_check_branch
        %167 = sbr.rel (%p165) target = $region20
      $region19: #{meta_learning_mlp.1} parent=11 // pred_region
        _
      $region20: #{meta_learning_mlp.1} parent=11 // pred_fallthru
        _
      // Predicated region
      $region21: #{meta_learning_mlp.1} parent=11 // pred_check
        %p168 = pneg %p100
      $region22: #{meta_learning_mlp.1} parent=11 // pred_check_branch
        %170 = sbr.rel (%p168) target = $region24
      $region23: #{meta_learning_mlp.1} parent=11 // pred_region
        _
      $region24: #{meta_learning_mlp.1} parent=11 // pred_fallthru
        _
      // Predicated region
      $region25: #{meta_learning_mlp.1} parent=11 // pred_check
        %p171 = pneg %p121
      $region26: #{meta_learning_mlp.1} parent=11 // pred_check_branch
        %173 = sbr.rel (%p171) target = $region28
      $region27: #{meta_learning_mlp.1} parent=11 // pred_region
        _
      $region28: #{meta_learning_mlp.1} parent=11 // pred_fallthru
        _
    $region12: #{meta_learning_mlp.1} parent=5 // pred_fallthru
      _
    %p174 = scmp.lt.s32.totalorder %s11, 2
    // Predicated region
    $region29: #{meta_learning_mlp.1} parent=5 // pred_check
      %p175 = pneg %p174
    $region30: #{meta_learning_mlp.1} parent=5 // pred_check_branch
      %177 = sbr.rel (%p175) target = $region32
    $region31: #{meta_learning_mlp.1} parent=5 // pred_region
      // Predicated region
      $region33: #{meta_learning_mlp.1} parent=31 // pred_check
        %p178 = pneg %p31
      $region34: #{meta_learning_mlp.1} parent=31 // pred_check_branch
        %180 = sbr.rel (%p178) target = $region36
      $region35: #{meta_learning_mlp.1} parent=31 // pred_region
        %p181 = scmp.lt.s32.totalorder %s11, 1
        %s182 = scalar_select %p181, %s11, 1
        %s183 = smul.addr %s182, 8
        %s184 = scalar_lea.vmem %s0, %s183
      $region36: #{meta_learning_mlp.1} parent=31 // pred_fallthru
        _
    $region32: #{meta_learning_mlp.1} parent=5 // pred_fallthru
      _
    %p185 = scmp.le.s32.totalorder 1, %s11
    %p186 = scmp.lt.s32.totalorder %s11, 3
    %p187 = pnand %p185, %p186
    %p188 = pneg %p187
    // Predicated region
    $region37: #{meta_learning_mlp.1} parent=5 // pred_check
      _
    $region38: #{meta_learning_mlp.1} parent=5 // pred_check_branch
      %190 = sbr.rel (%p187) target = $region40
    $region39: #{meta_learning_mlp.1} parent=5 // pred_region
      %s191 = ssub.s32 %s11, 1
      %p192 = scmp.lt.s32.totalorder %s16, 1
      %s193 = scalar_select %p192, %s16, 1
      %s194 = smul.addr %s193, 8
      %s195 = scalar_lea.vmem %s0, %s194
      %p196 = pneg %p37
      %p197 = pneg %p34
      %p198 = pneg %p58
      %p199 = pneg %p55
      %p200 = pneg %p79
      %p201 = pneg %p76
      %p202 = pneg %p100
      %p203 = pneg %p97
      %p204 = pneg %p121
      %p205 = pneg %p118
      %p206 = pneg %p147
      %p207 = pneg %p144
      %p208 = scmp.lt.s32.totalorder %s16, 1
      %s209 = scalar_select %p208, %s16, 1
      %s210 = smul.addr %s209, 8
      %s211 = scalar_lea.vmem %s5, %s210
      %p212 = scmp.lt.s32.totalorder %s16, 1
      %s213 = scalar_select %p212, %s16, 1
      %s214 = smul.addr %s213, 8
      %s215 = scalar_lea.vmem %s0, %s214
      %p216 = scmp.lt.s32.totalorder %s16, 1
      %s217 = scalar_select %p216, %s16, 1
      %s218 = smul.addr %s217, 8
      %s219 = scalar_lea.vmem %s5, %s218
      %v221 = vld [vmem:[%s215] sm:$0xff]
      %v222 = vpack.c.bf16 %v221, %v221
      %v223 = vld [vmem:[%s1] sm:$0xf]
      %v224 = vld [vmem:[%s1 + $0x4] sm:$0xf]
      %v225 = vld [vmem:[%s2] sm:$0x1]
      %v227 = vlaneseq
      %v228 = vshrl.u32 %v227, 7
      %v229 = vsub.s32 0, %v228
      %v230 = vrot.slane %v225, %v229
      %v234 = vunpack.c.l.b16 %v223
      %v235 = vunpack.c.l.b16 %v224
      %v236 = vpack.c.b16 %v235, %v234
      %vm238 = vcmask 130048
      %v240 = vsel %vm238, %v222, 0
      %242 = vmatprep.subr.bf16.mxu0 0
      %243 = vmatpush1.bf16.msra.mxu0 0
      %244 = vmatprep.subr.bf16.mxu0 0
      %245 = vmatpush1.bf16.msra.mxu0 0
      %246 = vmatprep.subr.bf16.mxu0 0
      %247 = vmatpush1.bf16.msra.mxu0 0
      %248 = vmatprep.subr.bf16.mxu0 0
      %249 = vmatpush1.bf16.msra.mxu0 0
      %250 = vmatprep.subr.bf16.mxu0 0
      %251 = vmatpush1.bf16.msra.mxu0 0
      %252 = vmatprep.subr.bf16.mxu0 0
      %253 = vmatpush1.bf16.msra.mxu0 0
      %254 = vmatprep.subr.bf16.mxu0 0
      %255 = vmatpush1.bf16.msra.mxu0 0
      %256 = vmatprep.subr.bf16.mxu0 0
      %257 = vmatpush1.bf16.msra.mxu0 %v236
      %258 = vmatprep.subr.bf16.mxu0 0
      %259 = vmatpush2.bf16.msra.mxu0 0
      %260 = vmatprep.subr.bf16.mxu0 0
      %261 = vmatpush2.bf16.msra.mxu0 0
      %262 = vmatprep.subr.bf16.mxu0 0
      %263 = vmatpush2.bf16.msra.mxu0 0
      %264 = vmatprep.subr.bf16.mxu0 0
      %265 = vmatpush2.bf16.msra.mxu0 0
      %266 = vmatprep.subr.bf16.mxu0 0
      %267 = vmatpush2.bf16.msra.mxu0 0
      %268 = vmatprep.subr.bf16.mxu0 0
      %269 = vmatpush2.bf16.msra.mxu0 0
      %270 = vmatprep.subr.bf16.mxu0 0
      %271 = vmatpush2.bf16.msra.mxu0 0
      %272 = vmatprep.subr.bf16.mxu0 0
      %273 = vmatpush2.bf16.msra.mxu0 0
      %274 = vmatprep.mubr.bf16.mxu0 0
      %275 = vmatmul.mubr.bf16.gmra.mxu0 %v240
      %v276 = vpop.f32.mrf.mxu0
      %v277 = vadd.f32 %v230, %v276
      %v278 = vpop.f32.mrf.mxu0
      %v279 = vpop.f32.mrf.mxu0
      %v280 = vpop.f32.mrf.mxu0
      %281 = vdwg.mxu0
      %v282 = vmax.f32 %v277, 0.0
      %v283 = vpack.c.bf16 %v282, %v282
      %v284 = vld [vmem:[%s3] sm:$0xf]
      %v285 = vld [vmem:[%s3 + $0x4] sm:$0xf]
      %v286 = vld [vmem:[%s3 + $0x8] sm:$0xf]
      %v287 = vld [vmem:[%s3 + $0xc] sm:$0xf]
      %v288 = vld [vmem:[%s4] sm:$0x1]
      %v290 = vlaneseq
      %v291 = vshrl.u32 %v290, 7
      %v292 = vsub.s32 0, %v291
      %v293 = vrot.slane %v288, %v292
      %v299 = vunpack.c.l.b16 %v284
      %v300 = vunpack.c.l.b16 %v285
      %v301 = vunpack.c.l.b16 %v286
      %v302 = vunpack.c.l.b16 %v287
      %v303 = vpack.c.b16 %v300, %v299
      %v304 = vpack.c.b16 %v302, %v301
      %vm307 = vcmask 261120
      %v309 = vsel %vm307, %v283, 0
      %311 = vmatprep.subr.bf16.mxu0 0
      %312 = vmatpush1.bf16.msra.mxu0 0
      %313 = vmatprep.subr.bf16.mxu0 0
      %314 = vmatpush1.bf16.msra.mxu0 0
      %315 = vmatprep.subr.bf16.mxu0 0
      %316 = vmatpush1.bf16.msra.mxu0 0
      %317 = vmatprep.subr.bf16.mxu0 0
      %318 = vmatpush1.bf16.msra.mxu0 0
      %319 = vmatprep.subr.bf16.mxu0 0
      %320 = vmatpush1.bf16.msra.mxu0 0
      %321 = vmatprep.subr.bf16.mxu0 0
      %322 = vmatpush1.bf16.msra.mxu0 0
      %323 = vmatprep.subr.bf16.mxu0 0
      %324 = vmatpush1.bf16.msra.mxu0 %v304
      %325 = vmatprep.subr.bf16.mxu0 0
      %326 = vmatpush1.bf16.msra.mxu0 %v303
      %327 = vmatprep.subr.bf16.mxu0 0
      %328 = vmatpush2.bf16.msra.mxu0 0
      %329 = vmatprep.subr.bf16.mxu0 0
      %330 = vmatpush2.bf16.msra.mxu0 0
      %331 = vmatprep.subr.bf16.mxu0 0
      %332 = vmatpush2.bf16.msra.mxu0 0
      %333 = vmatprep.subr.bf16.mxu0 0
      %334 = vmatpush2.bf16.msra.mxu0 0
      %335 = vmatprep.subr.bf16.mxu0 0
      %336 = vmatpush2.bf16.msra.mxu0 0
      %337 = vmatprep.subr.bf16.mxu0 0
      %338 = vmatpush2.bf16.msra.mxu0 0
      %339 = vmatprep.subr.bf16.mxu0 0
      %340 = vmatpush2.bf16.msra.mxu0 0
      %341 = vmatprep.subr.bf16.mxu0 0
      %342 = vmatpush2.bf16.msra.mxu0 0
      %343 = vmatprep.mubr.bf16.mxu0 0
      %344 = vmatmul.mubr.bf16.gmra.mxu0 %v309
      %v345 = vpop.f32.mrf.mxu0
      %v346 = vadd.f32 %v293, %v345
      %v347 = vpop.f32.mrf.mxu0
      %v348 = vpop.f32.mrf.mxu0
      %v349 = vpop.f32.mrf.mxu0
      %350 = vdwg.mxu0
      %vm351 = vcmask 64512
      %352 = vst.msk [vmem:[%s219] sm:$0xff] %vm351, %v346
      %p353 = scmp.lt.s32.totalorder %s16, 1
      %s354 = scalar_select %p353, %s16, 1
      %s355 = smul.addr %s354, 8
      %s356 = scalar_lea.vmem %s5, %s355
      // Predicated region
      $region41: #{meta_learning_mlp.1} parent=39 // pred_check
        %p357 = pneg %p144
      $region42: #{meta_learning_mlp.1} parent=39 // pred_check_branch
        %359 = sbr.rel (%p357) target = $region44
      $region43: #{meta_learning_mlp.1} parent=39 // pred_region
        _
      $region44: #{meta_learning_mlp.1} parent=39 // pred_fallthru
        _
    $region40: #{meta_learning_mlp.1} parent=5 // pred_fallthru
      _
    %p360 = scmp.le.s32.totalorder 2, %s11
    // Predicated region
    $region45: #{meta_learning_mlp.1} parent=5 // pred_check
      %p361 = pneg %p360
    $region46: #{meta_learning_mlp.1} parent=5 // pred_check_branch
      %363 = sbr.rel (%p361) target = $region48
    $region47: #{meta_learning_mlp.1} parent=5 // pred_region
      %s364 = ssub.s32 %s11, 2
      // Predicated region
      $region49: #{meta_learning_mlp.1} parent=47 // pred_check
        %p365 = pneg %p150
      $region50: #{meta_learning_mlp.1} parent=47 // pred_check_branch
        %367 = sbr.rel (%p365) target = $region52
      $region51: #{meta_learning_mlp.1} parent=47 // pred_region
        %p368 = scmp.lt.s32.totalorder %s17, 1
        %s369 = scalar_select %p368, %s17, 1
        %s370 = smul.addr %s369, 8
        %s371 = scalar_lea.vmem %s5, %s370
      $region52: #{meta_learning_mlp.1} parent=47 // pred_fallthru
        _
    $region48: #{meta_learning_mlp.1} parent=5 // pred_fallthru
      _
  $region6: #{meta_learning_mlp.1} parent=0 // loop_footer
    %s15 = sadd.s32 1, %s11
  $region7: #{meta_learning_mlp.1} parent=0 // loop_footer_branch
    %10 = sbr.rel target = $region3
  $region8: #{meta_learning_mlp.1} parent=0 // loop_exit
    _

</llo_original>
